<compile_context>
chip_gen: v6e
topology: v6e:2x2x1
jax: 0.10.0
libtpu: 0.0.40
codegen_flags: <defaults>
</compile_context>

<pallas_src>
from functools import partial

import jax
import jax.numpy as jnp
from jax.experimental import pallas as pl
from jax.experimental.pallas import tpu as pltpu


def _round_up(x: int, m: int) -> int:
    return (x + m - 1) // m * m


# -----------------------------------------------------------------------------
# Pallas kernel
# -----------------------------------------------------------------------------
def _tf_embed_kernel(x_ref, w_ref, b_ref, o_ref, *, use_mxu: bool):
    # x_ref: (TILE_BL, d_inp)   f32 VMEM -- one tile of flattened B*L tokens
    # w_ref: (d_inp, d_model)   f32 VMEM -- whole weight, resident across grid
    # b_ref: (1, d_model)       f32 VMEM -- whole bias, resident across grid
    # o_ref: (TILE_BL, d_model) f32 VMEM
    x = x_ref[...]
    w = w_ref[...]
    b = b_ref[...]

    if use_mxu:
        # d_model is a multiple of 128: lane-dense output, contraction on the
        # otherwise-idle MXU (frees VALU/XLU slots, matters on v7x).
        o_ref[...] = jnp.dot(x, w, preferred_element_type=jnp.float32) + b
    else:
        # Tiny d_inp (<= 6) and d_model < 128: unrolled VPU broadcast-FMA chain
        # (free filler under the HBM roofline), exact f32 accumulation.
        d_inp = x.shape[1]  # static
        acc = b + x[:, 0:1] * w[0:1, :]
        for k in range(1, d_inp):  # static unroll
            acc = acc + x[:, k:k + 1] * w[k:k + 1, :]
        o_ref[...] = acc


# -----------------------------------------------------------------------------
# Tile / VMEM budgeting
# -----------------------------------------------------------------------------
_LANE = 128
_F32 = 4


def _choose_tile(bl: int, d_inp: int, d_model: int,
                 target_step_bytes: int = 8 << 20,      # HBM bytes moved / step
                 vmem_block_budget: int = 28 << 20) -> int:
    """Pick a token-tile size: big enough to amortize per-step overhead, small
    enough that the double-buffered blocks fit every generation's VMEM."""
    # HBM bytes actually moved per token (what the roofline sees).
    moved_per_tok = (d_inp + d_model) * _F32
    # VMEM bytes per token per buffer: last dim pads to 128 lanes, so the
    # (tile, d_inp<=6) x block inflates ~20x vs its raw size.
    vmem_per_tok = 2 * (_round_up(d_inp, _LANE) + _round_up(d_model, _LANE)) * _F32

    tile = max(target_step_bytes // moved_per_tok, 8)
    tile = min(tile, max(vmem_block_budget // vmem_per_tok, 8))
    tile = max(tile // 8 * 8, 8)
    tile = min(tile, _round_up(bl, 8))
    # Keep >= 2 grid steps so megacore sharding (v7x: 2 TCs) has work for both.
    if bl > 8 and pl.cdiv(bl, tile) < 2:
        tile = max(_round_up(pl.cdiv(bl, 2), 8), 8)
    return tile


def _vmem_bytes_estimate(tile: int, d_inp: int, d_model: int) -> int:
    x_blk = tile * _round_up(d_inp, _LANE) * _F32
    o_blk = tile * _round_up(d_model, _LANE) * _F32
    w_blk = _round_up(d_inp, 8) * _round_up(d_model, _LANE) * _F32
    b_blk = 8 * _round_up(d_model, _LANE) * _F32
    return 2 * (x_blk + o_blk + w_blk + b_blk)  # double-buffered


# -----------------------------------------------------------------------------
# Wrapper
# -----------------------------------------------------------------------------
def time_feature_embedding(x, weight, bias, *, tile_bl: int | None = None):
    """x: [B, L, d_inp] time features -> [B, L, d_model] float32.

    weight: [d_inp, d_model] (torch nn.Linear weight transposed)
    bias:   [d_model]
    """
    B, L, d_inp = x.shape
    d_model = weight.shape[1]
    assert weight.shape == (d_inp, d_model) and bias.shape == (d_model,)

    BL = B * L
    x2d = x.reshape(BL, d_inp).astype(jnp.float32)        # free (contiguous)
    w = weight.astype(jnp.float32)
    b2d = bias.astype(jnp.float32).reshape(1, d_model)

    tile = tile_bl if tile_bl is not None else _choose_tile(BL, d_inp, d_model)
    tile = max(min(tile, _round_up(BL, 8)) // 8 * 8, 8)

    # Ragged grid: no wrapper-side pad, no output slice.  Pallas masks the
    # OOB writes of the last partial block; its OOB x reads feed rows that are
    # discarded, so correctness is unaffected.
    grid = (pl.cdiv(BL, tile),)

    use_mxu = (d_model % 128 == 0)

    vmem_limit = min(48 << 20,
                     max(32 << 20, _vmem_bytes_estimate(tile, d_inp, d_model) + (2 << 20)))

    cost = pl.CostEstimate(
        flops=2 * BL * d_inp * d_model,
        transcendentals=0,
        bytes_accessed=(BL * d_inp * _F32            # x read
                        + d_inp * d_model * _F32     # weight read (resident)
                        + d_model * _F32             # bias read (resident)
                        + BL * d_model * _F32),      # out write
    )

    out = pl.pallas_call(
        partial(_tf_embed_kernel, use_mxu=use_mxu),
        out_shape=jax.ShapeDtypeStruct((BL, d_model), jnp.float32),
        grid=grid,
        in_specs=[
            pl.BlockSpec((tile, d_inp), lambda i: (i, 0)),     # streaming tokens
            pl.BlockSpec((d_inp, d_model), lambda i: (0, 0)),  # resident weight
            pl.BlockSpec((1, d_model), lambda i: (0, 0)),      # resident bias
        ],
        out_specs=pl.BlockSpec((tile, d_model), lambda i: (i, 0)),
        compiler_params=pltpu.CompilerParams(
            dimension_semantics=("parallel",),   # independent tiles -> megacore
            vmem_limit_bytes=vmem_limit,
        ),
        cost_estimate=cost,
    )(x2d, w, b2d)

    return out.reshape(B, L, d_model)              # free (contiguous)


# -----------------------------------------------------------------------------
# Pure-JAX reference (for verification)
# -----------------------------------------------------------------------------
def time_feature_embedding_ref(x, weight, bias):
    return jnp.einsum("bli,io->blo", x.astype(jnp.float32),
                      weight.astype(jnp.float32)) + bias.astype(jnp.float32)


if __name__ == "__main__":
    freq_map = {"h": 4, "t": 5, "s": 6, "m": 1, "a": 1, "w": 2, "d": 3, "b": 3}
    key = jax.random.PRNGKey(0)

    # Two small configs:
    #   1) d_model=32  (VPU path, even grid)
    #   2) d_model=128 (lane-dense MXU path, ragged last grid block: BL=21)
    configs = [("h", 32, 2, 8), ("t", 128, 3, 7)]

    for freq, d_model, B, L in configs:
        d_inp = freq_map[freq]
        key, kx, kw, kb = jax.random.split(key, 4)
        x = jax.random.normal(kx, (B, L, d_inp), dtype=jnp.float32)
        # torch nn.Linear keeps weight as (d_model, d_inp); we store transposed.
        bound = 1.0 / (d_inp ** 0.5)
        weight = jax.random.uniform(kw, (d_inp, d_model), jnp.float32, -bound, bound)
        bias = jax.random.uniform(kb, (d_model,), jnp.float32, -bound, bound)

        out = jax.block_until_ready(time_feature_embedding(x, weight, bias))
        ref = time_feature_embedding_ref(x, weight, bias)

        assert out.shape == (B, L, d_model), (out.shape, (B, L, d_model))
        assert jnp.allclose(out, ref, atol=1e-5, rtol=1e-5), (freq, d_model)

    print("KERNEL_OK")
</pallas_src>

<mosaic_0001>
module attributes {stable_mosaic.version = 11 : i64} {
  func.func @_tf_embed_kernel(%arg0: i32, %arg1: memref<8x4xf32, #tpu.memory_space<vmem>>, %arg2: memref<4x32xf32, #tpu.memory_space<vmem>>, %arg3: memref<1x32xf32, #tpu.memory_space<vmem>>, %arg4: memref<8x32xf32, #tpu.memory_space<vmem>>) attributes {dimension_semantics = [#tpu.dimension_semantics<parallel>], iteration_bounds = array<i64: 2>, scalar_prefetch = 0 : i64, scratch_operands = 0 : i64, tpu.core_type = #tpu.core_type<tc>, window_params = [{transform_indices = @transform_0, window_bounds = array<i64: 8, 4>}, {pipeline_mode = #tpu.pipeline_mode<synchronous>, transform_indices = @transform_1, window_bounds = array<i64: 4, 32>}, {pipeline_mode = #tpu.pipeline_mode<synchronous>, transform_indices = @transform_2, window_bounds = array<i64: 1, 32>}, {transform_indices = @transform_3, window_bounds = array<i64: 8, 32>}]} {
    %c0 = arith.constant 0 : index
    %c0_0 = arith.constant 0 : index
    %0 = vector.load %arg1[%c0, %c0_0] : memref<8x4xf32, #tpu.memory_space<vmem>>, vector<8x4xf32>
    %c0_1 = arith.constant 0 : index
    %c0_2 = arith.constant 0 : index
    %1 = vector.load %arg2[%c0_1, %c0_2] : memref<4x32xf32, #tpu.memory_space<vmem>>, vector<4x32xf32>
    %c0_3 = arith.constant 0 : index
    %c0_4 = arith.constant 0 : index
    %2 = vector.load %arg3[%c0_3, %c0_4] : memref<1x32xf32, #tpu.memory_space<vmem>>, vector<1x32xf32>
    %3 = vector.extract_strided_slice %0 {offsets = [0, 0], sizes = [8, 1], strides = [1, 1]} : vector<8x4xf32> to vector<8x1xf32>
    %4 = vector.extract_strided_slice %1 {offsets = [0, 0], sizes = [1, 32], strides = [1, 1]} : vector<4x32xf32> to vector<1x32xf32>
    %5 = vector.broadcast %3 : vector<8x1xf32> to vector<8x32xf32>
    %6 = vector.broadcast %4 : vector<1x32xf32> to vector<8x32xf32>
    %7 = arith.mulf %5, %6 : vector<8x32xf32>
    %8 = vector.broadcast %2 : vector<1x32xf32> to vector<8x32xf32>
    %9 = arith.addf %8, %7 : vector<8x32xf32>
    %10 = vector.extract_strided_slice %0 {offsets = [0, 1], sizes = [8, 1], strides = [1, 1]} : vector<8x4xf32> to vector<8x1xf32>
    %11 = vector.extract_strided_slice %1 {offsets = [1, 0], sizes = [1, 32], strides = [1, 1]} : vector<4x32xf32> to vector<1x32xf32>
    %12 = vector.broadcast %10 : vector<8x1xf32> to vector<8x32xf32>
    %13 = vector.broadcast %11 : vector<1x32xf32> to vector<8x32xf32>
    %14 = arith.mulf %12, %13 : vector<8x32xf32>
    %15 = arith.addf %9, %14 : vector<8x32xf32>
    %16 = vector.extract_strided_slice %0 {offsets = [0, 2], sizes = [8, 1], strides = [1, 1]} : vector<8x4xf32> to vector<8x1xf32>
    %17 = vector.extract_strided_slice %1 {offsets = [2, 0], sizes = [1, 32], strides = [1, 1]} : vector<4x32xf32> to vector<1x32xf32>
    %18 = vector.broadcast %16 : vector<8x1xf32> to vector<8x32xf32>
    %19 = vector.broadcast %17 : vector<1x32xf32> to vector<8x32xf32>
    %20 = arith.mulf %18, %19 : vector<8x32xf32>
    %21 = arith.addf %15, %20 : vector<8x32xf32>
    %22 = vector.extract_strided_slice %0 {offsets = [0, 3], sizes = [8, 1], strides = [1, 1]} : vector<8x4xf32> to vector<8x1xf32>
    %23 = vector.extract_strided_slice %1 {offsets = [3, 0], sizes = [1, 32], strides = [1, 1]} : vector<4x32xf32> to vector<1x32xf32>
    %24 = vector.broadcast %22 : vector<8x1xf32> to vector<8x32xf32>
    %25 = vector.broadcast %23 : vector<1x32xf32> to vector<8x32xf32>
    %26 = arith.mulf %24, %25 : vector<8x32xf32>
    %27 = arith.addf %21, %26 : vector<8x32xf32>
    %c0_5 = arith.constant 0 : index
    %c0_6 = arith.constant 0 : index
    %28 = vector.load %arg4[%c0_5, %c0_6] : memref<8x32xf32, #tpu.memory_space<vmem>>, vector<8x32xf32>
    tpu.vector_store %arg4[%c0_5, %c0_6], %27 {strides = array<i32>} : memref<8x32xf32, #tpu.memory_space<vmem>>, vector<8x32xf32>,
    return
  }
  func.func @transform_0(%arg0: i32) -> (i32, i32) {
    %c0_i32 = arith.constant 0 : i32
    %c0_i32_0 = arith.constant 0 : i32
    return %arg0, %c0_i32 : i32, i32
  }
  func.func @transform_1(%arg0: i32) -> (i32, i32) {
    %c0_i32 = arith.constant 0 : i32
    %c0_i32_0 = arith.constant 0 : i32
    %c0_i32_1 = arith.constant 0 : i32
    return %c0_i32, %c0_i32_0 : i32, i32
  }
  func.func @transform_2(%arg0: i32) -> (i32, i32) {
    %c0_i32 = arith.constant 0 : i32
    %c0_i32_0 = arith.constant 0 : i32
    %c0_i32_1 = arith.constant 0 : i32
    return %c0_i32, %c0_i32_0 : i32, i32
  }
  func.func @transform_3(%arg0: i32) -> (i32, i32) {
    %c0_i32 = arith.constant 0 : i32
    %c0_i32_0 = arith.constant 0 : i32
    return %arg0, %c0_i32 : i32, i32
  }
}

</mosaic_0001>

<llo_original>
// kernel: tpu_custom_call.1
$region0: #{tpu_custom_call.1}
  #allocation0 [shape = 'u32[]', space=smem, size = 0x4, offset = 0x4, fixed_abs, tag = 'smem constant byte address 0x4 - core index']
  #allocation1 [shape = 'u32[144,128]{1,0:T(1,128)}', space=vmem, size = 0x12000, scoped, tag = 'internal scratch']
  %s0 = inlined_call_operand.vmem [shape: f32[16,4], index: 0, kind: input, shape index: {}]
  %s1 = inlined_call_operand.vmem [shape: f32[4,32], index: 1, kind: input, shape index: {}]
  %s2 = inlined_call_operand.vmem [shape: f32[1,32], index: 2, kind: input, shape index: {}]
  %s3 = inlined_call_operand.hbm [shape: f32[16,32], index: 3, kind: output, shape index: {}]
  %s4 = sld [smem:[#allocation0]]
  $region45: #{tpu_custom_call.1} parent=0
    _
  %s6 = ssub.s32 1, %s4
  %s7 = scalar_select 0, %s6, %s4
  $region1: #{tpu_custom_call.1} parent=0
    #allocation2 [shape = 'u8[8192]{0}', space=vmem, size = 0x2000, scoped, tag = 'output window, operand 0']
    #allocation3 [shape = 's32[2]{0}', space=sflag, size = 0x8, scoped, tag = 'scoped memory for tpu_custom_call.1']
    %8 = vsyncpa [#allocation3], 0
    %s9 = scalar_lea.sflag [#allocation3], 1
    %10 = vsyncpa %s9, 0
    loop: start=0, step=1, limit=4
    $region2: #{tpu_custom_call.1} parent=1 // loop_pre_header
      _
    $region3: #{tpu_custom_call.1} parent=1 // loop_header
      %s12 = sphi 0, %s16
      %p13 = scmp.ge.s32.totalorder %s12, 4
      %s22 = sphi 0, %s24
      %s25 = sphi 0, %s22
      %s26 = sphi 0, %s25
      %s42 = sphi 0, %s26
      %s46 = sphi 0, %s46
      %s48 = sphi 0, %s46
      %s49 = sphi 0, %s48
      %s63 = sphi 0, %s49
      %s67 = sphi 0, %s67
      %s69 = sphi 0, %s67
      %s70 = sphi 0, %s69
      %s84 = sphi 0, %s70
      %s90 = sphi 0, %s92
      %s93 = sphi 0, %s90
      %s94 = sphi 0, %s93
      %s110 = sphi 0, %s94
    $region4: #{tpu_custom_call.1} parent=1 // loop_header_branch
      %15 = sbr.rel (%p13) target = $region8
    $region5: #{tpu_custom_call.1} parent=1 // loop_body
      %s17 = ssub.s32 %s12, 1
      %s18 = ssub.s32 %s12, 2
      %s19 = sadd.s32 %s12, 1
      %s20 = ssub.s32 %s12, %s19
      %p21 = scmp.eq.s32.totalorder %s20, 0
      %s23 = sadd.s32 %s22, 1
      %s24 = scalar_select %p21, %s22, %s23
      %p27 = pneg %p21
      %p28 = scmp.eq.s32.totalorder %s12, 1
      %p29 = por %p27, %p28
      %p30 = scmp.ne.s32.totalorder %s22, %s25
      %p31 = scmp.eq.s32.totalorder %s12, 0
      %p32 = por %p30, %p31
      %p33 = scmp.ne.s32.totalorder %s22, %s25
      %p34 = scmp.eq.s32.totalorder %s17, 1
      %p35 = por %p33, %p34
      %p36 = scmp.ne.s32.totalorder %s25, %s26
      %p37 = scmp.eq.s32.totalorder %s17, 0
      %p38 = por %p36, %p37
      %p39 = scmp.ne.s32.totalorder %s25, %s26
      %p40 = scmp.eq.s32.totalorder %s18, 1
      %p41 = por %p39, %p40
      %p43 = scmp.ne.s32.totalorder %s26, %s42
      %p44 = scmp.eq.s32.totalorder %s18, 0
      %p45 = por %p43, %p44
      %s47 = sadd.s32 %s46, 1
      %p50 = scmp.eq.s32.totalorder %s12, 1
      %p51 = scmp.ne.s32.totalorder %s46, %s48
      %p52 = scmp.eq.s32.totalorder %s12, 0
      %p53 = por %p51, %p52
      %p54 = scmp.ne.s32.totalorder %s46, %s48
      %p55 = scmp.eq.s32.totalorder %s17, 1
      %p56 = por %p54, %p55
      %p57 = scmp.ne.s32.totalorder %s48, %s49
      %p58 = scmp.eq.s32.totalorder %s17, 0
      %p59 = por %p57, %p58
      %p60 = scmp.ne.s32.totalorder %s48, %s49
      %p61 = scmp.eq.s32.totalorder %s18, 1
      %p62 = por %p60, %p61
      %p64 = scmp.ne.s32.totalorder %s49, %s63
      %p65 = scmp.eq.s32.totalorder %s18, 0
      %p66 = por %p64, %p65
      %s68 = sadd.s32 %s67, 1
      %p71 = scmp.eq.s32.totalorder %s12, 1
      %p72 = scmp.ne.s32.totalorder %s67, %s69
      %p73 = scmp.eq.s32.totalorder %s12, 0
      %p74 = por %p72, %p73
      %p75 = scmp.ne.s32.totalorder %s67, %s69
      %p76 = scmp.eq.s32.totalorder %s17, 1
      %p77 = por %p75, %p76
      %p78 = scmp.ne.s32.totalorder %s69, %s70
      %p79 = scmp.eq.s32.totalorder %s17, 0
      %p80 = por %p78, %p79
      %p81 = scmp.ne.s32.totalorder %s69, %s70
      %p82 = scmp.eq.s32.totalorder %s18, 1
      %p83 = por %p81, %p82
      %p85 = scmp.ne.s32.totalorder %s70, %s84
      %p86 = scmp.eq.s32.totalorder %s18, 0
      %p87 = por %p85, %p86
      %s88 = ssub.s32 %s12, %s19
      %p89 = scmp.eq.s32.totalorder %s88, 0
      %s91 = sadd.s32 %s90, 1
      %s92 = scalar_select %p89, %s90, %s91
      %p95 = pneg %p89
      %p96 = scmp.eq.s32.totalorder %s12, 1
      %p97 = por %p95, %p96
      %p98 = scmp.ne.s32.totalorder %s90, %s93
      %p99 = scmp.eq.s32.totalorder %s12, 0
      %p100 = por %p98, %p99
      %p101 = scmp.ne.s32.totalorder %s90, %s93
      %p102 = scmp.eq.s32.totalorder %s17, 1
      %p103 = por %p101, %p102
      %p104 = scmp.ne.s32.totalorder %s93, %s94
      %p105 = scmp.eq.s32.totalorder %s17, 0
      %p106 = por %p104, %p105
      %p107 = scmp.ne.s32.totalorder %s93, %s94
      %p108 = scmp.eq.s32.totalorder %s18, 1
      %p109 = por %p107, %p108
      %p111 = scmp.ne.s32.totalorder %s94, %s110
      %p112 = scmp.eq.s32.totalorder %s18, 0
      %p113 = por %p111, %p112
      %p114 = scmp.le.s32.totalorder 1, %s12
      %p115 = scmp.lt.s32.totalorder %s12, 3
      %p116 = pnand %p114, %p115
      %p117 = pneg %p116
      // Predicated region
      $region9: #{tpu_custom_call.1} parent=5 // pred_check
        _
      $region10: #{tpu_custom_call.1} parent=5 // pred_check_branch
        %119 = sbr.rel (%p116) target = $region12
      $region11: #{tpu_custom_call.1} parent=5 // pred_region
        %s120 = ssub.s32 %s12, 1
        // Predicated region
        $region13: #{tpu_custom_call.1} parent=11 // pred_check
          %p121 = pneg %p59
        $region14: #{tpu_custom_call.1} parent=11 // pred_check_branch
          %123 = sbr.rel (%p121) target = $region16
        $region15: #{tpu_custom_call.1} parent=11 // pred_region
          _
        $region16: #{tpu_custom_call.1} parent=11 // pred_fallthru
          _
        // Predicated region
        $region17: #{tpu_custom_call.1} parent=11 // pred_check
          %p124 = pneg %p80
        $region18: #{tpu_custom_call.1} parent=11 // pred_check_branch
          %126 = sbr.rel (%p124) target = $region20
        $region19: #{tpu_custom_call.1} parent=11 // pred_region
          _
        $region20: #{tpu_custom_call.1} parent=11 // pred_fallthru
          _
      $region12: #{tpu_custom_call.1} parent=5 // pred_fallthru
        _
      %p127 = scmp.lt.s32.totalorder %s12, 2
      // Predicated region
      $region21: #{tpu_custom_call.1} parent=5 // pred_check
        %p128 = pneg %p127
      $region22: #{tpu_custom_call.1} parent=5 // pred_check_branch
        %130 = sbr.rel (%p128) target = $region24
      $region23: #{tpu_custom_call.1} parent=5 // pred_region
        // Predicated region
        $region25: #{tpu_custom_call.1} parent=23 // pred_check
          %p131 = pneg %p32
        $region26: #{tpu_custom_call.1} parent=23 // pred_check_branch
          %133 = sbr.rel (%p131) target = $region28
        $region27: #{tpu_custom_call.1} parent=23 // pred_region
          %p134 = scmp.lt.s32.totalorder %s12, 1
          %s135 = scalar_select %p134, %s12, 1
          %s136 = smul.addr %s135, 8
          %s137 = scalar_lea.vmem %s0, %s136
        $region28: #{tpu_custom_call.1} parent=23 // pred_fallthru
          _
      $region24: #{tpu_custom_call.1} parent=5 // pred_fallthru
        _
      %p138 = scmp.le.s32.totalorder 1, %s12
      %p139 = scmp.lt.s32.totalorder %s12, 3
      %p140 = pnand %p138, %p139
      %p141 = pneg %p140
      // Predicated region
      $region29: #{tpu_custom_call.1} parent=5 // pred_check
        _
      $region30: #{tpu_custom_call.1} parent=5 // pred_check_branch
        %143 = sbr.rel (%p140) target = $region32
      $region31: #{tpu_custom_call.1} parent=5 // pred_region
        %s144 = ssub.s32 %s12, 1
        %p145 = scmp.lt.s32.totalorder %s17, 1
        %s146 = scalar_select %p145, %s17, 1
        %s147 = smul.addr %s146, 8
        %s148 = scalar_lea.vmem %s0, %s147
        %p149 = pneg %p38
        %p150 = pneg %p35
        %p151 = pneg %p59
        %p152 = pneg %p56
        %p153 = pneg %p80
        %p154 = pneg %p77
        %p155 = pneg %p106
        %p156 = pneg %p103
        %s157 = sand.u32 %s93, 1
        %s158 = scalar_lea.sflag [#allocation3], %s157
        %s159 = sand.u32 %s93, 1
        %s160 = smul.addr %s159, 8
        %s161 = scalar_lea.vmem [#allocation2], %s160
        %p162 = scmp.lt.s32.totalorder %s17, 1
        %s163 = scalar_select %p162, %s17, 1
        %s164 = smul.addr %s163, 8
        %s165 = scalar_lea.vmem %s0, %s164
        %v166 = vld [vmem:[%s165] sm:$0xff]
        %v167 = vld [vmem:[%s1] sm:$0xf]
        %v168 = vld [vmem:[%s2] sm:$0x1]
        %170 = vset.pattern.permute.xlu0 0
        %171 = vperm.xlu0 %170, %v166
        %v172 = vpop.permute.xlu0 %171
        %v174 = vlaneseq
        %v175 = vshrl.u32 %v174, 7
        %v176 = vsub.s32 0, %v175
        %v177 = vrot.slane %v167, %v176
        %v178 = vmul.f32 %v172, %v177
        %v180 = vlaneseq
        %v181 = vshrl.u32 %v180, 7
        %v182 = vsub.s32 0, %v181
        %v183 = vrot.slane %v168, %v182
        %v185 = vadd.f32 %v183, %v178
        %186 = vset.pattern.permute.xlu0 1
        %187 = vperm.xlu0 %186, %v166
        %v188 = vpop.permute.xlu0 %187
        %v190 = vlaneseq
        %v191 = vshrl.u32 %v190, 7
        %v192 = vsub.s32 1, %v191
        %v193 = vrot.slane %v167, %v192
        %v194 = vmul.f32 %v188, %v193
        %v195 = vadd.f32 %v185, %v194
        %196 = vset.pattern.permute.xlu0 2
        %197 = vperm.xlu0 %196, %v166
        %v198 = vpop.permute.xlu0 %197
        %v200 = vlaneseq
        %v201 = vshrl.u32 %v200, 7
        %v202 = vsub.s32 2, %v201
        %v203 = vrot.slane %v167, %v202
        %v204 = vmul.f32 %v198, %v203
        %v205 = vadd.f32 %v195, %v204
        %206 = vset.pattern.permute.xlu0 3
        %207 = vperm.xlu0 %206, %v166
        %v208 = vpop.permute.xlu0 %207
        %v210 = vlaneseq
        %v211 = vshrl.u32 %v210, 7
        %v212 = vsub.s32 3, %v211
        %v213 = vrot.slane %v167, %v212
        %v214 = vmul.f32 %v208, %v213
        %v215 = vadd.f32 %v205, %v214
        %vm216 = vcmask 261120
        %217 = vst.msk [vmem:[%s161] sm:$0xff] %vm216, %v215
        %s218 = sand.u32 %s93, 1
        %s219 = scalar_lea.sflag [#allocation3], %s218
        %s220 = sand.u32 %s93, 1
        %s221 = smul.addr %s220, 8
        %s222 = scalar_lea.vmem [#allocation2], %s221
        // Predicated region
        $region33: #{tpu_custom_call.1} parent=31 // pred_check
          %p223 = pneg %p103
        $region34: #{tpu_custom_call.1} parent=31 // pred_check_branch
          %225 = sbr.rel (%p223) target = $region36
        $region35: #{tpu_custom_call.1} parent=31 // pred_region
          %s227 = ssub.s32 128, 128
          %228 = vsyncadd %s219, %s227
          %s229 = smul.addr %s17, 128
          %s230 = scalar_lea.hbm %s3, %s229
          %s232 = sshll.u32 %s222, 4
          %s233 = int_to_ptr.vmem [resolvable:$true] %s232
          %235 = dma.vmem_to_hbm [thread:$0]  %s233, 128, %s230, %s219
        $region36: #{tpu_custom_call.1} parent=31 // pred_fallthru
          _
      $region32: #{tpu_custom_call.1} parent=5 // pred_fallthru
        _
      %p236 = scmp.le.s32.totalorder 2, %s12
      // Predicated region
      $region37: #{tpu_custom_call.1} parent=5 // pred_check
        %p237 = pneg %p236
      $region38: #{tpu_custom_call.1} parent=5 // pred_check_branch
        %239 = sbr.rel (%p237) target = $region40
      $region39: #{tpu_custom_call.1} parent=5 // pred_region
        %s240 = ssub.s32 %s12, 2
        // Predicated region
        $region41: #{tpu_custom_call.1} parent=39 // pred_check
          %p241 = pneg %p109
        $region42: #{tpu_custom_call.1} parent=39 // pred_check_branch
          %243 = sbr.rel (%p241) target = $region44
        $region43: #{tpu_custom_call.1} parent=39 // pred_region
          %s244 = sand.u32 %s94, 1
          %s245 = scalar_lea.sflag [#allocation3], %s244
          %s246 = sand.u32 %s94, 1
          %s247 = smul.addr %s246, 8
          %s248 = scalar_lea.vmem [#allocation2], %s247
          %249 = dma.done %s245, 128
        $region44: #{tpu_custom_call.1} parent=39 // pred_fallthru
          _
      $region40: #{tpu_custom_call.1} parent=5 // pred_fallthru
        _
    $region6: #{tpu_custom_call.1} parent=1 // loop_footer
      %s16 = sadd.s32 1, %s12
    $region7: #{tpu_custom_call.1} parent=1 // loop_footer_branch
      %11 = sbr.rel target = $region3
    $region8: #{tpu_custom_call.1} parent=1 // loop_exit
      _
    %250 = vsyncpa [#allocation3], 1
    %s251 = scalar_lea.sflag [#allocation3], 1
    %252 = vsyncpa %s251, 1

</llo_original>
